<compile_context>
chip_gen: v5e
topology: v5e:2x2
jax: 0.10.0
libtpu: 0.0.40
codegen_flags: <defaults>
</compile_context>

<pallas_src>
import functools

import jax
import jax.numpy as jnp
from jax.experimental import pallas as pl
from jax.experimental.pallas import tpu as pltpu


def _matmul_kernel(y_ref, a_ref, o_ref):
    """One (tm, d) output tile = (tm, d_prime) y tile @ resident A."""
    o_ref[...] = jnp.dot(
        y_ref[...], a_ref[...], preferred_element_type=jnp.float32
    ).astype(o_ref.dtype)


@functools.partial(jax.jit, static_argnames=("tm",))
def dagma_ts_forward(y, A, *, tm=None):
    """Pallas implementation of DagmaTS.forward: returns y @ A with shape (n, d)."""
    n, d_prime = y.shape
    d_prime_a, d = A.shape
    assert d_prime == d_prime_a

    y = y.astype(jnp.float32)
    A = A.astype(jnp.float32)

    if tm is None:
        # Small n: a single full-extent M block (exempt from the (8,128) rule),
        # zero grid overhead.
        # Large n: stream 1024-row tiles so DMA bursts are long and contiguous
        # and per-step grid overhead (~0.35 us) is amortized, while the grid
        # still has >= 2 programs so both v7x TensorCores get work.  A
        # (1024, d_prime) f32 tile plus its double buffer is far under the
        # scoped-VMEM limit on every TPU generation for realistic d_prime.
        tm = n if n <= 2048 else 1024

    grid_m = pl.cdiv(n, tm)

    cost = pl.CostEstimate(
        flops=2 * n * d_prime * d,
        transcendentals=0,
        bytes_accessed=4 * (n * d_prime + d_prime * d + n * d),
    )

    out = pl.pallas_call(
        _matmul_kernel,
        out_shape=jax.ShapeDtypeStruct((n, d), jnp.float32),
        grid_spec=pltpu.PrefetchScalarGridSpec(
            num_scalar_prefetch=0,
            grid=(grid_m,),
            in_specs=[
                # y: stream M tiles, full K extent (no reduction axis).
                pl.BlockSpec((tm, d_prime), lambda i: (i, 0)),
                # A: resident in VMEM for the whole grid (constant block idx).
                pl.BlockSpec((d_prime, d), lambda i: (0, 0)),
            ],
            out_specs=pl.BlockSpec((tm, d), lambda i: (i, 0)),
        ),
        compiler_params=pltpu.CompilerParams(
            dimension_semantics=("parallel",)
        ),
        cost_estimate=cost,
    )(y, A)

    return out


if __name__ == "__main__":
    # Module hyperparameters (small, consistent with DagmaTS(n, d, p)):
    n, d, p = 16, 8, 1
    d_prime = (p + 1) * d  # = 16

    key = jax.random.PRNGKey(0)
    ky, ka = jax.random.split(key)

    # Input dataset y: (n, d_prime).
    y = jax.random.normal(ky, (n, d_prime), dtype=jnp.float32)
    # Parameter A: (d_prime, d). nn.Parameter(torch.zeros(...)) in the module;
    # initialized randomly here so the matmul is non-trivial.
    A = 0.1 * jax.random.normal(ka, (d_prime, d), dtype=jnp.float32)

    out = dagma_ts_forward(y, A)
    jax.block_until_ready(out)
    ref = y @ A
    assert out.shape == (n, d)
    assert jnp.allclose(out, ref, atol=1e-5, rtol=1e-5), "mismatch vs reference"

    # Second check: exercise the multi-tile streaming path (grid_m > 1),
    # including a non-divisible last tile.
    n2, d2, p2 = 4100, 8, 3
    d_prime2 = (p2 + 1) * d2
    ky2, ka2 = jax.random.split(jax.random.PRNGKey(1))
    y2 = jax.random.normal(ky2, (n2, d_prime2), dtype=jnp.float32)
    A2 = 0.1 * jax.random.normal(ka2, (d_prime2, d2), dtype=jnp.float32)

    out2 = dagma_ts_forward(y2, A2)
    jax.block_until_ready(out2)
    ref2 = y2 @ A2
    assert out2.shape == (n2, d2)
    assert jnp.allclose(out2, ref2, atol=1e-4, rtol=1e-4), "mismatch vs reference (tiled)"

    print("KERNEL_OK")
</pallas_src>

<mosaic_0001>
module attributes {stable_mosaic.version = 11 : i64} {
  func.func @_matmul_kernel(%arg0: i32, %arg1: memref<16x16xf32, #tpu.memory_space<vmem>>, %arg2: memref<16x8xf32, #tpu.memory_space<vmem>>, %arg3: memref<16x8xf32, #tpu.memory_space<vmem>>) attributes {dimension_semantics = [#tpu.dimension_semantics<parallel>], iteration_bounds = array<i64: 1>, scalar_prefetch = 0 : i64, scratch_operands = 0 : i64, tpu.core_type = #tpu.core_type<tc>, window_params = [{transform_indices = @transform_0, window_bounds = array<i64: 16, 16>}, {pipeline_mode = #tpu.pipeline_mode<synchronous>, transform_indices = @transform_1, window_bounds = array<i64: 16, 8>}, {transform_indices = @transform_2, window_bounds = array<i64: 16, 8>}]} {
    %c0 = arith.constant 0 : index
    %c0_0 = arith.constant 0 : index
    %0 = vector.load %arg1[%c0, %c0_0] : memref<16x16xf32, #tpu.memory_space<vmem>>, vector<16x16xf32>
    %c0_1 = arith.constant 0 : index
    %c0_2 = arith.constant 0 : index
    %1 = vector.load %arg2[%c0_1, %c0_2] : memref<16x8xf32, #tpu.memory_space<vmem>>, vector<16x8xf32>
    %cst = arith.constant dense<0.000000e+00> : vector<16x8xf32>
    %2 = tpu.matmul %0, %1, %cst {dimension_numbers = #tpu.dot_dimension_numbers<[1], [0], [0], [1], [0, 0, 1, 1], [], []>} : vector<16x16xf32>, vector<16x8xf32>, vector<16x8xf32> -> vector<16x8xf32>
    %c0_3 = arith.constant 0 : index
    %c0_4 = arith.constant 0 : index
    %3 = vector.load %arg3[%c0_3, %c0_4] : memref<16x8xf32, #tpu.memory_space<vmem>>, vector<16x8xf32>
    tpu.vector_store %arg3[%c0_3, %c0_4], %2 {strides = array<i32>} : memref<16x8xf32, #tpu.memory_space<vmem>>, vector<16x8xf32>,
    return
  }
  func.func @transform_0(%arg0: i32) -> (i32, i32) {
    %c0_i32 = arith.constant 0 : i32
    %c0_i32_0 = arith.constant 0 : i32
    return %arg0, %c0_i32 : i32, i32
  }
  func.func @transform_1(%arg0: i32) -> (i32, i32) {
    %c0_i32 = arith.constant 0 : i32
    %c0_i32_0 = arith.constant 0 : i32
    %c0_i32_1 = arith.constant 0 : i32
    return %c0_i32, %c0_i32_0 : i32, i32
  }
  func.func @transform_2(%arg0: i32) -> (i32, i32) {
    %c0_i32 = arith.constant 0 : i32
    %c0_i32_0 = arith.constant 0 : i32
    return %arg0, %c0_i32 : i32, i32
  }
}

</mosaic_0001>

<llo_original>
// kernel: dagma_ts_forward.1
$region0: #{dagma_ts_forward.1}
  #allocation0 [shape = 'u32[]', space=smem, size = 0x4, offset = 0x4, fixed_abs, tag = 'smem constant byte address 0x4 - core index']
  #allocation1 [shape = 'u32[72,128]{1,0:T(1,128)}', space=vmem, size = 0x9000, scoped, tag = 'internal scratch']
  %s0 = inlined_call_operand.vmem [shape: f32[16,16], index: 0, kind: input, shape index: {}]
  %s1 = inlined_call_operand.vmem [shape: f32[16,8], index: 1, kind: input, shape index: {}]
  %s2 = inlined_call_operand.vmem [shape: f32[16,8], index: 2, kind: output, shape index: {}]
  %s3 = sld [smem:[#allocation0]]
  $region18: #{dagma_ts_forward.1} parent=0
    _
  %s5 = ssub.s32 1, %s3
  %s6 = scalar_select 0, %s5, %s3
  // Predicated region
  $region2: #{dagma_ts_forward.1} parent=0 // pred_check
    _
  $region3: #{dagma_ts_forward.1} parent=0 // pred_check_branch
    %8 = sbr.rel (0) target = $region5
  $region4: #{dagma_ts_forward.1} parent=0 // pred_region
    _
  $region5: #{dagma_ts_forward.1} parent=0 // pred_fallthru
    _
  // Predicated region
  $region6: #{dagma_ts_forward.1} parent=0 // pred_check
    _
  $region7: #{dagma_ts_forward.1} parent=0 // pred_check_branch
    %10 = sbr.rel (0) target = $region9
  $region8: #{dagma_ts_forward.1} parent=0 // pred_region
    _
  $region9: #{dagma_ts_forward.1} parent=0 // pred_fallthru
    _
  %v11 = vld [vmem:[%s0] sm:$0xff]
  %v12 = vld [vmem:[%s0 + $0x8] sm:$0xff]
  %v13 = vld [vmem:[%s1] sm:$0xff]
  %v14 = vld [vmem:[%s1 + $0x8] sm:$0xff]
  %vm15 = vcmask 130048
  %v17 = vsel %vm15, %v11, 0
  %v20 = vsel %vm15, %v12, 0
  %22 = vmatpush.msra.mxu0 0.0
  %23 = vmatpush.msra.mxu0 0.0
  %24 = vmatpush.msra.mxu0 0.0
  %25 = vmatpush.msra.mxu0 0.0
  %26 = vmatpush.msra.mxu0 0.0
  %27 = vmatpush.msra.mxu0 0.0
  %28 = vmatpush.msra.mxu0 0.0
  %29 = vmatpush.msra.mxu0 0.0
  %30 = vmatpush.msra.mxu0 0.0
  %31 = vmatpush.msra.mxu0 0.0
  %32 = vmatpush.msra.mxu0 0.0
  %33 = vmatpush.msra.mxu0 0.0
  %34 = vmatpush.msra.mxu0 0.0
  %35 = vmatpush.msra.mxu0 0.0
  %36 = vmatpush.msra.mxu0 %v14
  %37 = vmatpush.msra.mxu0 %v13
  %38 = vmatmul.f32.gmra.mxu0 %v17
  %v39 = vpop.f32.mrf.mxu0
  %v40 = vadd.f32 0.0, %v39
  %41 = vmatmul.f32.gmra.mxu0 %v20
  %v42 = vpop.f32.mrf.mxu0
  %v43 = vadd.f32 0.0, %v42
  %44 = vdwg.mxu0
  %vm45 = vcmask 64512
  %46 = vst.msk [vmem:[%s2] sm:$0xff] %vm45, %v40
  %47 = vst.msk [vmem:[%s2 + $0x8] sm:$0xff] %vm45, %v43
  // Predicated region
  $region10: #{dagma_ts_forward.1} parent=0 // pred_check
    _
  $region11: #{dagma_ts_forward.1} parent=0 // pred_check_branch
    %49 = sbr.rel (0) target = $region13
  $region12: #{dagma_ts_forward.1} parent=0 // pred_region
    _
  $region13: #{dagma_ts_forward.1} parent=0 // pred_fallthru
    _
  // Predicated region
  $region14: #{dagma_ts_forward.1} parent=0 // pred_check
    _
  $region15: #{dagma_ts_forward.1} parent=0 // pred_check_branch
    %51 = sbr.rel (0) target = $region17
  $region16: #{dagma_ts_forward.1} parent=0 // pred_region
    _
  $region17: #{dagma_ts_forward.1} parent=0 // pred_fallthru
    _

</llo_original>
